<compile_context>
chip_gen: v7x
topology: tpu7x:2x2x1
jax: 0.10.0
libtpu: 0.0.40
codegen_flags: <defaults>
</compile_context>

<pallas_src>
import jax
import jax.numpy as jnp
from jax.experimental import pallas as pl
from jax.experimental.pallas import tpu as pltpu


def _round_up(n, m):
    return ((n + m - 1) // m) * m


def _mlp_kernel(x_ref, w1_ref, b1_ref, w2_ref, b2_ref, w3_ref, b3_ref, o_ref):
    # x tile arrives in native f32 straight from HBM; cast to bf16 in-kernel
    # for the MXU (avoids a separate wrapper-side cast pass over HBM).
    x = x_ref[...].astype(jnp.bfloat16)

    # fc1 + ReLU -> (tile_b, 64): bf16 MXU operands, f32 accumulate/epilogue.
    h1 = jnp.dot(x, w1_ref[...], preferred_element_type=jnp.float32) + b1_ref[...]
    h1 = jnp.maximum(h1, 0.0)

    # fc2 + ReLU -> (tile_b, 128)
    h2 = jnp.dot(h1.astype(jnp.bfloat16), w2_ref[...],
                 preferred_element_type=jnp.float32) + b2_ref[...]
    h2 = jnp.maximum(h2, 0.0)

    # fc3 as w3(1,128) x h2(tile_b,128)^T -> (1, tile_b): the per-row scalar
    # lands lane-dense directly (no relayout needed for the lane-dense store),
    # and the M=1 matmul is negligible MXU work in this bandwidth-bound kernel.
    z = jax.lax.dot_general(
        w3_ref[...], h2,
        dimension_numbers=(((1,), (1,)), ((), ())),
        preferred_element_type=jnp.float32,
    ) + b3_ref[...]

    # Sigmoid on full vregs: exp and approx reciprocal both land in the EUP slot.
    o_ref[...] = pl.reciprocal(1.0 + jnp.exp(-z), approx=True)


def neural_net_forward(x, params, *, max_tile_b=8192):
    """x: (B, n_features) float32. Returns (B, 1) float32 sigmoid outputs."""
    w1, b1, w2, b2, w3, b3 = params
    B, F = x.shape

    # Resident operands (DMA'd once): bf16 weights for the MXU, f32 fc3 row +
    # scalar bias for the epilogue.
    w1_bf = w1.astype(jnp.bfloat16)
    w2_bf = w2.astype(jnp.bfloat16)
    w3_row = jnp.reshape(w3, (1, -1)).astype(jnp.float32)   # (1, 128)
    b3_s = jnp.reshape(b3, (1, 1)).astype(jnp.float32)      # (1, 1)

    # Batch tile: multiple of 128 (lane-dense output, aligned stores), capped
    # at max_tile_b, and at most ~half the batch so the grid keeps >= 2 steps
    # for megacore sharding on v7x.  If that tile would cover the whole batch
    # anyway, collapse to a single full-array block (block == array dims is
    # always legal, regardless of alignment).
    tile_b = max(128, min(max_tile_b, _round_up(pl.cdiv(B, 2), 128)))
    if tile_b >= B:
        tile_b = B
    num_tiles = pl.cdiv(B, tile_b)
    b_pad = num_tiles * tile_b          # lane extent of the (1, b_pad) output

    def resident(a):
        # Same block every grid step -> DMA'd once, stays resident in VMEM.
        return pl.BlockSpec(a.shape, lambda i: (0, 0))

    out = pl.pallas_call(
        _mlp_kernel,
        out_shape=jax.ShapeDtypeStruct((1, b_pad), jnp.float32),
        grid=(num_tiles,),
        in_specs=[
            pl.BlockSpec((tile_b, F), lambda i: (i, 0)),   # streamed f32 x tiles
            resident(w1_bf), resident(b1),
            resident(w2_bf), resident(b2),
            resident(w3_row), resident(b3_s),
        ],
        # Lane-dense output: one (1, tile_b) row slab per grid step.
        out_specs=pl.BlockSpec((1, tile_b), lambda i: (0, i)),
        compiler_params=pltpu.CompilerParams(
            dimension_semantics=("parallel",),   # megacore-shard batch on v7x
            vmem_limit_bytes=32 * 1024 * 1024,   # ~10 MiB used at tile=8192
        ),
    )(x, w1_bf, b1, w2_bf, b2, w3_row, b3_s)

    # Reshape lane-dense slab back to (B, 1); tail lanes (ragged last block)
    # are garbage and sliced off here.  Output bytes are tiny vs the x stream.
    return out[0, :B].reshape(B, 1)


def init_params(key, n_features):
    """Deterministic init mimicking nn.Linear's U(-1/sqrt(fan_in), 1/sqrt(fan_in))."""
    def linear(k, fan_in, fan_out):
        kw, kb = jax.random.split(k)
        bound = 1.0 / jnp.sqrt(jnp.asarray(fan_in, jnp.float32))
        # stored as [in, out] (transposed w.r.t. PyTorch's [out, in])
        w = jax.random.uniform(kw, (fan_in, fan_out), jnp.float32, -bound, bound)
        b = jax.random.uniform(kb, (1, fan_out), jnp.float32, -bound, bound)
        return w, b

    k1, k2, k3 = jax.random.split(key, 3)
    w1, b1 = linear(k1, n_features, 64)
    w2, b2 = linear(k2, 64, 128)
    w3, b3 = linear(k3, 128, 1)
    return (w1, b1, w2, b2, w3, b3)


def _reference_forward(x, params):
    """Pure-JAX f32 reference matching the PyTorch forward."""
    w1, b1, w2, b2, w3, b3 = params
    h1 = jnp.maximum(x @ w1 + b1, 0.0)
    h2 = jnp.maximum(h1 @ w2 + b2, 0.0)
    return jax.nn.sigmoid(h2 @ w3 + b3)


if __name__ == "__main__":
    key = jax.random.PRNGKey(0)
    k_x1, k_x2, k_p = jax.random.split(key, 3)

    n_features = 32
    params = init_params(k_p, n_features)

    # Primary small test: single full-array block.
    batch = 8
    x1 = jax.random.normal(k_x1, (batch, n_features), jnp.float32)
    out1 = jax.block_until_ready(neural_net_forward(x1, params))
    ref1 = _reference_forward(x1, params)
    assert out1.shape == (batch, 1)
    # bf16 MXU operands + approx-reciprocal sigmoid -> loose f32 tolerance.
    assert jnp.allclose(out1, ref1, atol=2e-2, rtol=0.0)

    # Multi-tile + ragged-last-block + lane-dense-output path.
    batch2 = 300
    x2 = jax.random.normal(k_x2, (batch2, n_features), jnp.float32)
    out2 = jax.block_until_ready(neural_net_forward(x2, params))
    ref2 = _reference_forward(x2, params)
    assert out2.shape == (batch2, 1)
    assert jnp.allclose(out2, ref2, atol=2e-2, rtol=0.0)

    print("KERNEL_OK")
</pallas_src>

<mosaic_0001>
module attributes {stable_mosaic.version = 11 : i64} {
  func.func @_mlp_kernel(%arg0: i32, %arg1: memref<8x32xf32, #tpu.memory_space<vmem>>, %arg2: memref<32x64xbf16, #tpu.memory_space<vmem>>, %arg3: memref<1x64xf32, #tpu.memory_space<vmem>>, %arg4: memref<64x128xbf16, #tpu.memory_space<vmem>>, %arg5: memref<1x128xf32, #tpu.memory_space<vmem>>, %arg6: memref<1x128xf32, #tpu.memory_space<vmem>>, %arg7: memref<1x1xf32, #tpu.memory_space<vmem>>, %arg8: memref<1x8xf32, #tpu.memory_space<vmem>>) attributes {dimension_semantics = [#tpu.dimension_semantics<parallel>], iteration_bounds = array<i64: 1>, scalar_prefetch = 0 : i64, scratch_operands = 0 : i64, tpu.core_type = #tpu.core_type<tc>, window_params = [{transform_indices = @transform_0, window_bounds = array<i64: 8, 32>}, {pipeline_mode = #tpu.pipeline_mode<synchronous>, transform_indices = @transform_1, window_bounds = array<i64: 32, 64>}, {pipeline_mode = #tpu.pipeline_mode<synchronous>, transform_indices = @transform_2, window_bounds = array<i64: 1, 64>}, {pipeline_mode = #tpu.pipeline_mode<synchronous>, transform_indices = @transform_3, window_bounds = array<i64: 64, 128>}, {pipeline_mode = #tpu.pipeline_mode<synchronous>, transform_indices = @transform_4, window_bounds = array<i64: 1, 128>}, {pipeline_mode = #tpu.pipeline_mode<synchronous>, transform_indices = @transform_5, window_bounds = array<i64: 1, 128>}, {pipeline_mode = #tpu.pipeline_mode<synchronous>, transform_indices = @transform_6, window_bounds = array<i64: 1, 1>}, {transform_indices = @transform_7, window_bounds = array<i64: 1, 8>}]} {
    %c0 = arith.constant 0 : index
    %c0_0 = arith.constant 0 : index
    %0 = vector.load %arg1[%c0, %c0_0] : memref<8x32xf32, #tpu.memory_space<vmem>>, vector<8x32xf32>
    %1 = arith.truncf %0 : vector<8x32xf32> to vector<8x32xbf16>
    %c0_1 = arith.constant 0 : index
    %c0_2 = arith.constant 0 : index
    %2 = vector.load %arg2[%c0_1, %c0_2] : memref<32x64xbf16, #tpu.memory_space<vmem>>, vector<32x64xbf16>
    %cst = arith.constant dense<0.000000e+00> : vector<8x64xf32>
    %3 = tpu.matmul %1, %2, %cst {dimension_numbers = #tpu.dot_dimension_numbers<[1], [0], [0], [1], [0, 0, 1, 1], [], []>} : vector<8x32xbf16>, vector<32x64xbf16>, vector<8x64xf32> -> vector<8x64xf32>
    %c0_3 = arith.constant 0 : index
    %c0_4 = arith.constant 0 : index
    %4 = vector.load %arg3[%c0_3, %c0_4] : memref<1x64xf32, #tpu.memory_space<vmem>>, vector<1x64xf32>
    %5 = vector.broadcast %4 : vector<1x64xf32> to vector<8x64xf32>
    %6 = arith.addf %3, %5 : vector<8x64xf32>
    %cst_5 = arith.constant 0.000000e+00 : f32
    %7 = vector.broadcast %cst_5 : f32 to vector<8x64xf32>
    %8 = arith.maximumf %6, %7 : vector<8x64xf32>
    %9 = arith.truncf %8 : vector<8x64xf32> to vector<8x64xbf16>
    %c0_6 = arith.constant 0 : index
    %c0_7 = arith.constant 0 : index
    %10 = vector.load %arg4[%c0_6, %c0_7] : memref<64x128xbf16, #tpu.memory_space<vmem>>, vector<64x128xbf16>
    %cst_8 = arith.constant dense<0.000000e+00> : vector<8x128xf32>
    %11 = tpu.matmul %9, %10, %cst_8 {dimension_numbers = #tpu.dot_dimension_numbers<[1], [0], [0], [1], [0, 0, 1, 1], [], []>} : vector<8x64xbf16>, vector<64x128xbf16>, vector<8x128xf32> -> vector<8x128xf32>
    %c0_9 = arith.constant 0 : index
    %c0_10 = arith.constant 0 : index
    %12 = vector.load %arg5[%c0_9, %c0_10] : memref<1x128xf32, #tpu.memory_space<vmem>>, vector<1x128xf32>
    %13 = vector.broadcast %12 : vector<1x128xf32> to vector<8x128xf32>
    %14 = arith.addf %11, %13 : vector<8x128xf32>
    %cst_11 = arith.constant 0.000000e+00 : f32
    %15 = vector.broadcast %cst_11 : f32 to vector<8x128xf32>
    %16 = arith.maximumf %14, %15 : vector<8x128xf32>
    %c0_12 = arith.constant 0 : index
    %c0_13 = arith.constant 0 : index
    %17 = vector.load %arg6[%c0_12, %c0_13] : memref<1x128xf32, #tpu.memory_space<vmem>>, vector<1x128xf32>
    %cst_14 = arith.constant dense<0.000000e+00> : vector<1x8xf32>
    %18 = tpu.matmul %17, %16, %cst_14 {dimension_numbers = #tpu.dot_dimension_numbers<[1], [1], [0], [0], [0, 0, 1, 0], [], []>} : vector<1x128xf32>, vector<8x128xf32>, vector<1x8xf32> -> vector<1x8xf32>
    %c0_15 = arith.constant 0 : index
    %c0_16 = arith.constant 0 : index
    %19 = vector.load %arg7[%c0_15, %c0_16] : memref<1x1xf32, #tpu.memory_space<vmem>>, vector<1x1xf32>
    %20 = vector.broadcast %19 : vector<1x1xf32> to vector<1x8xf32>
    %21 = arith.addf %18, %20 : vector<1x8xf32>
    %cst_17 = arith.constant 0.000000e+00 : f32
    %22 = vector.broadcast %cst_17 : f32 to vector<1x8xf32>
    %23 = arith.subf %22, %21 : vector<1x8xf32>
    %24 = math.exp %23 : vector<1x8xf32>
    %cst_18 = arith.constant 1.000000e+00 : f32
    %25 = vector.broadcast %cst_18 : f32 to vector<1x8xf32>
    %26 = arith.addf %25, %24 : vector<1x8xf32>
    %27 = tpu.reciprocal %26 {approx = true} : vector<1x8xf32> -> vector<1x8xf32>
    %c0_19 = arith.constant 0 : index
    %c0_20 = arith.constant 0 : index
    %28 = vector.load %arg8[%c0_19, %c0_20] : memref<1x8xf32, #tpu.memory_space<vmem>>, vector<1x8xf32>
    tpu.vector_store %arg8[%c0_19, %c0_20], %27 {strides = array<i32>} : memref<1x8xf32, #tpu.memory_space<vmem>>, vector<1x8xf32>,
    return
  }
  func.func @transform_0(%arg0: i32) -> (i32, i32) {
    %c0_i32 = arith.constant 0 : i32
    %c0_i32_0 = arith.constant 0 : i32
    return %arg0, %c0_i32 : i32, i32
  }
  func.func @transform_1(%arg0: i32) -> (i32, i32) {
    %c0_i32 = arith.constant 0 : i32
    %c0_i32_0 = arith.constant 0 : i32
    %c0_i32_1 = arith.constant 0 : i32
    return %c0_i32, %c0_i32_0 : i32, i32
  }
  func.func @transform_2(%arg0: i32) -> (i32, i32) {
    %c0_i32 = arith.constant 0 : i32
    %c0_i32_0 = arith.constant 0 : i32
    %c0_i32_1 = arith.constant 0 : i32
    return %c0_i32, %c0_i32_0 : i32, i32
  }
  func.func @transform_3(%arg0: i32) -> (i32, i32) {
    %c0_i32 = arith.constant 0 : i32
    %c0_i32_0 = arith.constant 0 : i32
    %c0_i32_1 = arith.constant 0 : i32
    return %c0_i32, %c0_i32_0 : i32, i32
  }
  func.func @transform_4(%arg0: i32) -> (i32, i32) {
    %c0_i32 = arith.constant 0 : i32
    %c0_i32_0 = arith.constant 0 : i32
    %c0_i32_1 = arith.constant 0 : i32
    return %c0_i32, %c0_i32_0 : i32, i32
  }
  func.func @transform_5(%arg0: i32) -> (i32, i32) {
    %c0_i32 = arith.constant 0 : i32
    %c0_i32_0 = arith.constant 0 : i32
    %c0_i32_1 = arith.constant 0 : i32
    return %c0_i32, %c0_i32_0 : i32, i32
  }
  func.func @transform_6(%arg0: i32) -> (i32, i32) {
    %c0_i32 = arith.constant 0 : i32
    %c0_i32_0 = arith.constant 0 : i32
    %c0_i32_1 = arith.constant 0 : i32
    return %c0_i32, %c0_i32_0 : i32, i32
  }
  func.func @transform_7(%arg0: i32) -> (i32, i32) {
    %c0_i32 = arith.constant 0 : i32
    %c0_i32_0 = arith.constant 0 : i32
    return %c0_i32, %arg0 : i32, i32
  }
}

</mosaic_0001>

<llo_original>
// kernel: tpu_custom_call.1
$region0: #{tpu_custom_call.1}
  #allocation0 [shape = 'u32[]', space=smem, size = 0x4, offset = 0x4, fixed_abs, tag = 'smem constant byte address 0x4 - core index']
  #allocation1 [shape = 'u32[144,128]{1,0:T(1,128)}', space=vmem, size = 0x12000, scoped, tag = 'internal scratch']
  #allocation2 [shape = 'f32[1,1]{1,0:T(1,128)S(1)}', space=vmem, size = 0x200, scoped, tag = 'scoped memory for tpu_custom_call.1']
  %s0 = inlined_call_operand.hbm [shape: f32[8,32], index: 0, kind: input, shape index: {}]
  %s1 = inlined_call_operand.hbm [shape: bf16[32,64], index: 1, kind: input, shape index: {}]
  %s2 = inlined_call_operand.vmem [shape: f32[1,64], index: 2, kind: input, shape index: {}]
  %s3 = inlined_call_operand.hbm [shape: bf16[64,128], index: 3, kind: input, shape index: {}]
  %s4 = inlined_call_operand.vmem [shape: f32[1,128], index: 4, kind: input, shape index: {}]
  %s5 = inlined_call_operand.vmem [shape: f32[1,128], index: 5, kind: input, shape index: {}]
  %s6 = inlined_call_operand.<no memory space> [shape: f32[1,1], index: 6, kind: input, shape index: {}]
  %s7 = inlined_call_operand.hbm [shape: f32[1,8], index: 7, kind: output, shape index: {}]
  %s8 = sld [smem:[#allocation0]]
  $region50: #{tpu_custom_call.1} parent=0
    _
  %s10 = ssub.s32 1, %s8
  %s11 = scalar_select 0, %s10, %s8
  %v12 = vstv %s6
  %13 = vst [vmem:[#allocation2] sm:$0x1] %v12
  $region1: #{tpu_custom_call.1} parent=0
    #allocation3 [shape = 'u8[4096]{0}', space=vmem, size = 0x1000, scoped, tag = 'input window, operand 0, single buffered']
    #allocation4 [shape = 's32[1]{0}', space=sflag, size = 0x4, scoped, tag = 'scoped memory for tpu_custom_call.1']
    #allocation5 [shape = 's32[1]{0}', space=sflag, size = 0x4, scoped, tag = 'scoped memory for tpu_custom_call.1']
    #allocation6 [shape = 'u8[8192]{0}', space=vmem, size = 0x2000, scoped, tag = 'input window, operand 1, single buffered']
    #allocation7 [shape = 's32[1]{0}', space=sflag, size = 0x4, scoped, tag = 'scoped memory for tpu_custom_call.1']
    #allocation8 [shape = 'u8[16384]{0}', space=vmem, size = 0x4000, scoped, tag = 'input window, operand 3, single buffered']
    #allocation9 [shape = 'u8[512]{0}', space=vmem, size = 0x400, scoped, tag = 'output window, operand 0, single buffered']
    %14 = vsyncpa [#allocation4], 0
    %15 = vsyncpa [#allocation7], 0
    %16 = vsyncpa [#allocation5], 0
    // Predicated region
    $region2: #{tpu_custom_call.1} parent=1 // pred_check
      _
    $region3: #{tpu_custom_call.1} parent=1 // pred_check_branch
      %18 = sbr.rel (0) target = $region5
    $region4: #{tpu_custom_call.1} parent=1 // pred_region
      %s20 = ssub.s32 128, 128
      %21 = vsyncadd [#allocation4], %s20
      %s23 = sshll.u32 [#allocation3], 4
      %s24 = int_to_ptr.vmem [resolvable:$true] %s23
      %26 = dma.hbm_to_vmem [thread:$0]  %s0, 128, %s24, [#allocation4]
    $region5: #{tpu_custom_call.1} parent=1 // pred_fallthru
      _
    // Predicated region
    $region6: #{tpu_custom_call.1} parent=1 // pred_check
      _
    $region7: #{tpu_custom_call.1} parent=1 // pred_check_branch
      %28 = sbr.rel (0) target = $region9
    $region8: #{tpu_custom_call.1} parent=1 // pred_region
      %s30 = ssub.s32 256, 256
      %31 = vsyncadd [#allocation7], %s30
      %s32 = sshll.u32 [#allocation6], 4
      %s33 = int_to_ptr.vmem [resolvable:$true] %s32
      %38 = dma.hbm_to_vmem [thread:$0]  %s1, 256, %s33, [#allocation7], 64, 64, 4
    $region9: #{tpu_custom_call.1} parent=1 // pred_fallthru
      _
    // Predicated region
    $region10: #{tpu_custom_call.1} parent=1 // pred_check
      _
    $region11: #{tpu_custom_call.1} parent=1 // pred_check_branch
      %40 = sbr.rel (0) target = $region13
    $region12: #{tpu_custom_call.1} parent=1 // pred_region
      _
    $region13: #{tpu_custom_call.1} parent=1 // pred_fallthru
      _
    // Predicated region
    $region14: #{tpu_custom_call.1} parent=1 // pred_check
      _
    $region15: #{tpu_custom_call.1} parent=1 // pred_check_branch
      %42 = sbr.rel (0) target = $region17
    $region16: #{tpu_custom_call.1} parent=1 // pred_region
      %s44 = ssub.s32 512, 512
      %45 = vsyncadd [#allocation7], %s44
      %s46 = sshll.u32 [#allocation8], 4
      %s47 = int_to_ptr.vmem [resolvable:$true] %s46
      %52 = dma.hbm_to_vmem [thread:$0]  %s3, 512, %s47, [#allocation7], 64, 64, 4
    $region17: #{tpu_custom_call.1} parent=1 // pred_fallthru
      _
    // Predicated region
    $region18: #{tpu_custom_call.1} parent=1 // pred_check
      _
    $region19: #{tpu_custom_call.1} parent=1 // pred_check_branch
      %54 = sbr.rel (0) target = $region21
    $region20: #{tpu_custom_call.1} parent=1 // pred_region
      _
    $region21: #{tpu_custom_call.1} parent=1 // pred_fallthru
      _
    // Predicated region
    $region22: #{tpu_custom_call.1} parent=1 // pred_check
      _
    $region23: #{tpu_custom_call.1} parent=1 // pred_check_branch
      %56 = sbr.rel (0) target = $region25
    $region24: #{tpu_custom_call.1} parent=1 // pred_region
      _
    $region25: #{tpu_custom_call.1} parent=1 // pred_fallthru
      _
    // Predicated region
    $region26: #{tpu_custom_call.1} parent=1 // pred_check
      _
    $region27: #{tpu_custom_call.1} parent=1 // pred_check_branch
      %58 = sbr.rel (0) target = $region29
    $region28: #{tpu_custom_call.1} parent=1 // pred_region
      _
    $region29: #{tpu_custom_call.1} parent=1 // pred_fallthru
      _
    // Predicated region
    $region30: #{tpu_custom_call.1} parent=1 // pred_check
      _
    $region31: #{tpu_custom_call.1} parent=1 // pred_check_branch
      %60 = sbr.rel (0) target = $region33
    $region32: #{tpu_custom_call.1} parent=1 // pred_region
      %61 = dma.done [#allocation4], 128
    $region33: #{tpu_custom_call.1} parent=1 // pred_fallthru
      _
    // Predicated region
    $region34: #{tpu_custom_call.1} parent=1 // pred_check
      _
    $region35: #{tpu_custom_call.1} parent=1 // pred_check_branch
      %63 = sbr.rel (0) target = $region37
    $region36: #{tpu_custom_call.1} parent=1 // pred_region
      %64 = dma.done [#allocation7], 256
    $region37: #{tpu_custom_call.1} parent=1 // pred_fallthru
      _
    // Predicated region
    $region38: #{tpu_custom_call.1} parent=1 // pred_check
      _
    $region39: #{tpu_custom_call.1} parent=1 // pred_check_branch
      %66 = sbr.rel (0) target = $region41
    $region40: #{tpu_custom_call.1} parent=1 // pred_region
      %67 = dma.done [#allocation7], 512
    $region41: #{tpu_custom_call.1} parent=1 // pred_fallthru
      _
    %v69 = vld [vmem:[#allocation3] sm:$0xff]
    %v70 = vpack.c.bf16 %v69, %v69
    %v71 = vld [vmem:[#allocation6] sm:$0xf]
    %v72 = vld [vmem:[#allocation6 + $0x4] sm:$0xf]
    %v73 = vld [vmem:[#allocation6 + $0x8] sm:$0xf]
    %v74 = vld [vmem:[#allocation6 + $0xc] sm:$0xf]
    %v75 = vld [vmem:[%s2] sm:$0x1]
    %v77 = vlaneseq
    %v78 = vshrl.u32 %v77, 7
    %v79 = vsub.s32 0, %v78
    %v80 = vrot.slane %v75, %v79
    %v86 = vunpack.c.l.b16 %v71
    %v87 = vunpack.c.l.b16 %v72
    %v88 = vunpack.c.l.b16 %v73
    %v89 = vunpack.c.l.b16 %v74
    %v90 = vpack.c.b16 %v87, %v86
    %v91 = vpack.c.b16 %v89, %v88
    %vm94 = vcmask 261120
    %v96 = vsel %vm94, %v70, 0
    %98 = vmatprep.subr.bf16.mxu0 0
    %99 = vmatpush1.bf16.msra.mxu0 %v90
    %100 = vmatprep.subr.bf16.mxu0 0
    %101 = vmatpush1.bf16.msra.mxu0 %v91
    %102 = vmatprep.subr.bf16.mxu0 0
    %103 = vmatpush1.bf16.msra.mxu0 0
    %104 = vmatprep.subr.bf16.mxu0 0
    %105 = vmatpush1.bf16.msra.mxu0 0
    %106 = vmatprep.subr.bf16.mxu0 0
    %107 = vmatpush1.bf16.msra.mxu0 0
    %108 = vmatprep.subr.bf16.mxu0 0
    %109 = vmatpush1.bf16.msra.mxu0 0
    %110 = vmatprep.subr.bf16.mxu0 0
    %111 = vmatpush1.bf16.msra.mxu0 0
    %112 = vmatprep.subr.bf16.mxu0 0
    %113 = vmatpush1.bf16.msra.mxu0 0
    %114 = vmatprep.subr.bf16.mxu0 0
    %115 = vmatpush1.bf16.msra.mxu0 0
    %116 = vmatprep.subr.bf16.mxu0 0
    %117 = vmatpush1.bf16.msra.mxu0 0
    %118 = vmatprep.subr.bf16.mxu0 0
    %119 = vmatpush1.bf16.msra.mxu0 0
    %120 = vmatprep.subr.bf16.mxu0 0
    %121 = vmatpush1.bf16.msra.mxu0 0
    %122 = vmatprep.subr.bf16.mxu0 0
    %123 = vmatpush1.bf16.msra.mxu0 0
    %124 = vmatprep.subr.bf16.mxu0 0
    %125 = vmatpush1.bf16.msra.mxu0 0
    %126 = vmatprep.subr.bf16.mxu0 0
    %127 = vmatpush1.bf16.msra.mxu0 0
    %128 = vmatprep.subr.bf16.mxu0 0
    %129 = vmatpush1.bf16.msra.mxu0 0
    %130 = vmatprep.mubr.bf16.mxu0 0
    %131 = vmatmul.mubr.bf16.gmra.mrb[0].mxu0 %v96
    %v132 = vpop.f32.mrb[0].mxu0
    %v133 = vadd.f32 %v80, %v132
    %v134 = vpop.f32.mrb[0].mxu0
    %v135 = vpop.f32.mrb[0].mxu0
    %v136 = vpop.f32.mrb[0].mxu0
    %137 = vdwg.mxu0
    %v138 = vmax.f32 %v133, 0.0
    %v139 = vpack.c.bf16 %v138, %v138
    %v140 = vld [vmem:[#allocation8] sm:$0xf]
    %v141 = vld [vmem:[#allocation8 + $0x4] sm:$0xf]
    %v142 = vld [vmem:[#allocation8 + $0x8] sm:$0xf]
    %v143 = vld [vmem:[#allocation8 + $0xc] sm:$0xf]
    %v144 = vld [vmem:[#allocation8 + $0x10] sm:$0xf]
    %v145 = vld [vmem:[#allocation8 + $0x14] sm:$0xf]
    %v146 = vld [vmem:[#allocation8 + $0x18] sm:$0xf]
    %v147 = vld [vmem:[#allocation8 + $0x1c] sm:$0xf]
    %v148 = vld [vmem:[%s4] sm:$0x1]
    %v150 = vlaneseq
    %v151 = vshrl.u32 %v150, 7
    %v152 = vsub.s32 0, %v151
    %v153 = vrot.slane %v148, %v152
    %v163 = vunpack.c.l.b16 %v140
    %v164 = vunpack.c.l.b16 %v141
    %v165 = vunpack.c.l.b16 %v142
    %v166 = vunpack.c.l.b16 %v143
    %v167 = vunpack.c.l.b16 %v144
    %v168 = vunpack.c.l.b16 %v145
    %v169 = vunpack.c.l.b16 %v146
    %v170 = vunpack.c.l.b16 %v147
    %v171 = vpack.c.b16 %v164, %v163
    %v172 = vpack.c.b16 %v166, %v165
    %v173 = vpack.c.b16 %v168, %v167
    %v174 = vpack.c.b16 %v170, %v169
    %vm179 = vcmask 523264
    %v181 = vsel %vm179, %v139, 0
    %183 = vmatprep.subr.bf16.mxu0 0
    %184 = vmatpush1.bf16.msra.mxu0 %v171
    %185 = vmatprep.subr.bf16.mxu0 0
    %186 = vmatpush1.bf16.msra.mxu0 %v172
    %187 = vmatprep.subr.bf16.mxu0 0
    %188 = vmatpush1.bf16.msra.mxu0 %v173
    %189 = vmatprep.subr.bf16.mxu0 0
    %190 = vmatpush1.bf16.msra.mxu0 %v174
    %191 = vmatprep.subr.bf16.mxu0 0
    %192 = vmatpush1.bf16.msra.mxu0 0
    %193 = vmatprep.subr.bf16.mxu0 0
    %194 = vmatpush1.bf16.msra.mxu0 0
    %195 = vmatprep.subr.bf16.mxu0 0
    %196 = vmatpush1.bf16.msra.mxu0 0
    %197 = vmatprep.subr.bf16.mxu0 0
    %198 = vmatpush1.bf16.msra.mxu0 0
    %199 = vmatprep.subr.bf16.mxu0 0
    %200 = vmatpush1.bf16.msra.mxu0 0
    %201 = vmatprep.subr.bf16.mxu0 0
    %202 = vmatpush1.bf16.msra.mxu0 0
    %203 = vmatprep.subr.bf16.mxu0 0
    %204 = vmatpush1.bf16.msra.mxu0 0
    %205 = vmatprep.subr.bf16.mxu0 0
    %206 = vmatpush1.bf16.msra.mxu0 0
    %207 = vmatprep.subr.bf16.mxu0 0
    %208 = vmatpush1.bf16.msra.mxu0 0
    %209 = vmatprep.subr.bf16.mxu0 0
    %210 = vmatpush1.bf16.msra.mxu0 0
    %211 = vmatprep.subr.bf16.mxu0 0
    %212 = vmatpush1.bf16.msra.mxu0 0
    %213 = vmatprep.subr.bf16.mxu0 0
    %214 = vmatpush1.bf16.msra.mxu0 0
    %215 = vmatprep.mubr.bf16.mxu0 0
    %216 = vmatmul.mubr.bf16.gmra.mrb[0].mxu0 %v181
    %v217 = vpop.f32.mrb[0].mxu0
    %v218 = vadd.f32 %v153, %v217
    %v219 = vpop.f32.mrb[0].mxu0
    %v220 = vpop.f32.mrb[0].mxu0
    %v221 = vpop.f32.mrb[0].mxu0
    %222 = vdwg.mxu0
    %v223 = vmax.f32 %v218, 0.0
    %v224 = vld [vmem:[%s5] sm:$0x1]
    %v225 = vld [vmem:[#allocation2] sm:$0x1]
    %227 = vset.pattern.permute.xlu0 0
    %228 = vperm.xlu0 %227, %v225
    %v229 = vpop.permute.xlu0 %228
    %v231 = vlaneseq
    %v232 = vshrl.u32 %v231, 7
    %v233 = vsub.s32 0, %v232
    %v234 = vrot.slane %v229, %v233
    %235 = vmatprep.subr.mxu0 0.0
    %236 = vmatpush1.xpose.msra.mxu0 %v223
    %237 = vmatprep.subr.mxu0 0.0
    %238 = vmatpush1.xpose.msra.mxu0 0.0
    %239 = vmatprep.subr.mxu0 0.0
    %240 = vmatpush1.xpose.msra.mxu0 0.0
    %241 = vmatprep.subr.mxu0 0.0
    %242 = vmatpush1.xpose.msra.mxu0 0.0
    %243 = vmatprep.subr.mxu0 0.0
    %244 = vmatpush1.xpose.msra.mxu0 0.0
    %245 = vmatprep.subr.mxu0 0.0
    %246 = vmatpush1.xpose.msra.mxu0 0.0
    %247 = vmatprep.subr.mxu0 0.0
    %248 = vmatpush1.xpose.msra.mxu0 0.0
    %249 = vmatprep.subr.mxu0 0.0
    %250 = vmatpush1.xpose.msra.mxu0 0.0
    %251 = vmatprep.subr.mxu0 0.0
    %252 = vmatpush1.xpose.msra.mxu0 0.0
    %253 = vmatprep.subr.mxu0 0.0
    %254 = vmatpush1.xpose.msra.mxu0 0.0
    %255 = vmatprep.subr.mxu0 0.0
    %256 = vmatpush1.xpose.msra.mxu0 0.0
    %257 = vmatprep.subr.mxu0 0.0
    %258 = vmatpush1.xpose.msra.mxu0 0.0
    %259 = vmatprep.subr.mxu0 0.0
    %260 = vmatpush1.xpose.msra.mxu0 0.0
    %261 = vmatprep.subr.mxu0 0.0
    %262 = vmatpush1.xpose.msra.mxu0 0.0
    %263 = vmatprep.subr.mxu0 0.0
    %264 = vmatpush1.xpose.msra.mxu0 0.0
    %265 = vmatprep.subr.mxu0 0.0
    %266 = vmatpush1.xpose.msra.mxu0 0.0
    %267 = vmatprep.subr.mxu0 0.0
    %268 = vmatpush1.xpose.msra.mxu0 0.0
    %269 = vmatprep.subr.mxu0 0.0
    %270 = vmatpush1.xpose.msra.mxu0 0.0
    %271 = vmatprep.subr.mxu0 0.0
    %272 = vmatpush1.xpose.msra.mxu0 0.0
    %273 = vmatprep.subr.mxu0 0.0
    %274 = vmatpush1.xpose.msra.mxu0 0.0
    %275 = vmatprep.subr.mxu0 0.0
    %276 = vmatpush1.xpose.msra.mxu0 0.0
    %277 = vmatprep.subr.mxu0 0.0
    %278 = vmatpush1.xpose.msra.mxu0 0.0
    %279 = vmatprep.subr.mxu0 0.0
    %280 = vmatpush1.xpose.msra.mxu0 0.0
    %281 = vmatprep.subr.mxu0 0.0
    %282 = vmatpush1.xpose.msra.mxu0 0.0
    %283 = vmatprep.subr.mxu0 0.0
    %284 = vmatpush1.xpose.msra.mxu0 0.0
    %285 = vmatprep.subr.mxu0 0.0
    %286 = vmatpush1.xpose.msra.mxu0 0.0
    %287 = vmatprep.subr.mxu0 0.0
    %288 = vmatpush1.xpose.msra.mxu0 0.0
    %289 = vmatprep.subr.mxu0 0.0
    %290 = vmatpush1.xpose.msra.mxu0 0.0
    %291 = vmatprep.subr.mxu0 0.0
    %292 = vmatpush1.xpose.msra.mxu0 0.0
    %293 = vmatprep.subr.mxu0 0.0
    %294 = vmatpush1.xpose.msra.mxu0 0.0
    %295 = vmatprep.subr.mxu0 0.0
    %296 = vmatpush1.xpose.msra.mxu0 0.0
    %297 = vmatprep.subr.mxu0 0.0
    %298 = vmatpush1.xpose.msra.mxu0 0.0
    %299 = vmatprep.mubr.f32.mxu0 0.0
    %300 = vmatmul.mubr.f32.gmra.mrb[0].mxu0 %v224
    %v301 = vpop.f32.mrb[0].mxu0
    %v302 = vadd.f32 %v234, %v301
    %v303 = vpop.f32.mrb[0].mxu0
    %304 = vdwg.mxu0
    %v305 = vsub.f32 0.0, %v302
    %v306 = vmul.f32 %v305, 1.442695
    %v307 = vpow.pop %v306
    %v308 = vadd.f32 %v307, 1.0
    %v309 = vrcp.pop %v308
    %vm310 = vcmask 57344
    %311 = vst.msk [vmem:[#allocation9] sm:$0x1] %vm310, %v309
    // Predicated region
    $region42: #{tpu_custom_call.1} parent=1 // pred_check
      _
    $region43: #{tpu_custom_call.1} parent=1 // pred_check_branch
      %313 = sbr.rel (0) target = $region45
    $region44: #{tpu_custom_call.1} parent=1 // pred_region
      %s315 = ssub.s32 16, 16
      %316 = vsyncadd [#allocation5], %s315
      %s318 = sshll.u32 [#allocation9], 4
      %s319 = int_to_ptr.vmem [resolvable:$true] %s318
      %321 = dma.vmem_to_hbm [thread:$0]  %s319, 16, %s7, [#allocation5]
    $region45: #{tpu_custom_call.1} parent=1 // pred_fallthru
      _
    // Predicated region
    $region46: #{tpu_custom_call.1} parent=1 // pred_check
      _
    $region47: #{tpu_custom_call.1} parent=1 // pred_check_branch
      %323 = sbr.rel (0) target = $region49
    $region48: #{tpu_custom_call.1} parent=1 // pred_region
      %324 = dma.done [#allocation5], 16
    $region49: #{tpu_custom_call.1} parent=1 // pred_fallthru
      _
    %325 = vsyncpa [#allocation4], 1
    %326 = vsyncpa [#allocation7], 1
    %327 = vsyncpa [#allocation5], 1

</llo_original>
